<compile_context>
chip_gen: v6e
topology: v6e:2x2x1
jax: 0.10.0
libtpu: 0.0.40
codegen_flags: <defaults>
</compile_context>

<pallas_src>
import functools

import jax
import jax.numpy as jnp
import numpy as np
from jax import lax
from jax.experimental import pallas as pl
from jax.experimental.pallas import tpu as pltpu


def _round_up(n: int, m: int) -> int:
    return ((n + m - 1) // m) * m


def _device_kind() -> str:
    try:
        return jax.devices()[0].device_kind.lower()
    except Exception:
        return ""


def _elu(z_f32, compute_dtype):
    """ELU (alpha=1).  `z_f32` is the f32 (MXU-accumulated + bias) pre-activation.

    f32 path: exp(x)-1 with a 2-term Taylor patch near 0- (expm1-level accuracy
    without relying on a lax.expm1 Mosaic lowering).  bf16 path (v6e/v7x): plain
    exp(x)-1 -- bf16 rounding dominates any expm1 cancellation there.
    Both branches of the select are evaluated (exp of large x -> inf is
    discarded by the where; no NaN is produced).
    """
    if compute_dtype == jnp.float32:
        em1 = jnp.exp(z_f32) - 1.0
        em1 = jnp.where(z_f32 > -1e-3, z_f32 * (1.0 + 0.5 * z_f32), em1)
        return jnp.where(z_f32 > 0.0, z_f32, em1)
    z = z_f32.astype(compute_dtype)
    one = jnp.asarray(1.0, compute_dtype)
    return jnp.where(z > 0, z, jnp.exp(z) - one)


def mlp_kernel(x_ref, w1_ref, b1_ref, w2_ref, b2_ref, w3_ref, b3_ref, o_ref,
               *, sb, elu_dtype):
    """One batch tile: y = ELU(ELU(x@W1+b1)@W2+b2)@W3+b3 (lane-packed layout).

    The tile is walked in `sb`-row sub-blocks so the f32 intermediates stay
    small regardless of how big the DMA tile is.
    """
    n_sub = x_ref.shape[0] // sb
    b1 = b1_ref[...].astype(jnp.float32)
    b2 = b2_ref[...].astype(jnp.float32)
    b3 = b3_ref[...].astype(jnp.float32)

    def sub_block(r0):
        xs = x_ref[pl.ds(r0, sb), :]
        # Layer 1: bf16 x bf16 -> f32 accumulate on the MXU; bias in f32.
        h1 = jnp.dot(xs, w1_ref[...], preferred_element_type=jnp.float32) + b1
        h1 = _elu(h1, elu_dtype).astype(w2_ref.dtype)
        # Layer 2.
        h2 = jnp.dot(h1, w2_ref[...], preferred_element_type=jnp.float32) + b2
        h2 = _elu(h2, elu_dtype).astype(w3_ref.dtype)
        # Layer 3 (no activation in forward()).
        y = jnp.dot(h2, w3_ref[...], preferred_element_type=jnp.float32) + b3
        o_ref[pl.ds(r0, sb), :] = y.astype(o_ref.dtype)

    if n_sub == 1:
        sub_block(0)
    else:
        def body(s, carry):
            sub_block(pl.multiple_of(s * sb, sb))
            return carry
        lax.fori_loop(0, n_sub, body, 0, unroll=min(n_sub, 8))


def mlp_forward(x, w1, b1, w2, b2, w3, b3, *, tile_b=8192):
    """Fused MLP forward:  ELU(ELU(x@w1+b1)@w2+b2)@w3+b3   -> [B, Q] float32.

    x:  [B, D_in]            (bf16 recommended; f32 also works)
    w1: [D_in, H1], b1: [1, H1]
    w2: [H1,  H2],  b2: [1, H2]
    w3: [H2,  Q],   b3: [1, Q]
    tile_b: target number of *original* batch rows per grid step.
    """
    B, D_in = x.shape
    H1 = w1.shape[1]
    H2 = w2.shape[1]
    Q = w3.shape[1]

    kind = _device_kind()
    is_old_gen = any(t in kind for t in ("v2", "v3", "v4", "v5"))  # 128-deep MXU
    is_v7 = "v7" in kind
    two_tc = any(t in kind for t in ("v7", "v5p", "v4"))           # megacore-style
    target_k = 128 if is_old_gen else 256

    # ------------------- lane-packing factor R ------------------------------
    max_dim = max(D_in, H1, H2, Q)
    R = 1 if max_dim > 128 else max(1, target_k // max_dim)
    Kp, N1, N2, Nq = R * D_in, R * H1, R * H2, R * Q

    # ------------------- block-diagonal weight / bias replicas --------------
    wdt = w1.dtype
    eye = jnp.eye(R, dtype=jnp.float32)
    pack_w = lambda w: jnp.kron(eye, w.astype(jnp.float32)).astype(wdt)
    pack_b = lambda b: jnp.tile(b.astype(jnp.float32), (1, R))
    w1p, w2p, w3p = pack_w(w1), pack_w(w2), pack_w(w3)
    b1p, b2p, b3p = pack_b(b1), pack_b(b2), pack_b(b3)

    x_item = jnp.dtype(x.dtype).itemsize

    # ------------------- batch tiling over packed rows ----------------------
    rows = pl.cdiv(B, R)                                   # packed rows needed
    tile_rows = max(8, _round_up(pl.cdiv(int(tile_b), R), 8))
    # Per-tile VMEM budget for the double-buffered x/out streams (~24 MiB).
    per_row = Kp * x_item + Nq * 4
    tile_rows = min(tile_rows, max(8, (12 * 2**20) // per_row))
    if two_tc and rows > 512:
        # Guarantee >= 2 grid steps so ("parallel",) can shard across both TCs.
        tile_rows = min(tile_rows, _round_up(pl.cdiv(rows, 2), 8))
    tile_rows = min(tile_rows, _round_up(rows, 8))
    tile_rows = _round_up(tile_rows, 8)
    sb = min(256, tile_rows)                               # in-kernel sub-block
    tile_rows = _round_up(tile_rows, sb)

    grid_b = pl.cdiv(rows, tile_rows)
    if two_tc and grid_b > 1 and grid_b % 2 == 1:
        grid_b += 1                                        # balance the two TCs
    rows_pad = grid_b * tile_rows
    B_pad = rows_pad * R
    if B_pad != B:
        # Zero-padded rows flow through harmlessly and are sliced off below.
        x = jnp.pad(x, ((0, B_pad - B), (0, 0)))
    xp = x.reshape(rows_pad, Kp)                           # lane-pack the batch

    # ------------------- cost estimate & explicit VMEM budget ---------------
    def nbytes(a):
        return int(np.prod(a.shape)) * jnp.dtype(a.dtype).itemsize

    param_bytes = sum(nbytes(a) for a in (w1p, b1p, w2p, b2p, w3p, b3p))
    cost = pl.CostEstimate(
        flops=2 * rows_pad * (Kp * N1 + N1 * N2 + N2 * Nq),
        transcendentals=rows_pad * (N1 + N2),              # exp in the two ELUs
        bytes_accessed=rows_pad * Kp * x_item + param_bytes + rows_pad * Nq * 4,
    )
    inter_bytes = 4 * sb * max(N1, N2) * 4                 # f32 sub-block temps
    vmem_need = 2 * tile_rows * per_row + 2 * param_bytes + inter_bytes
    vmem_cap = (48 << 20) if is_v7 else (96 << 20)         # 64 MiB phys on v7x
    vmem_limit = int(min(max(2 * vmem_need, 16 << 20), vmem_cap))

    # bf16 ELU only where a bf16 VPU/EUP path exists and weights are bf16.
    elu_dtype = (jnp.bfloat16
                 if (jnp.dtype(wdt) == jnp.bfloat16 and not is_old_gen)
                 else jnp.float32)

    # Weights / biases are tiny (<< VMEM): constant index_map -> fetched once.
    full = lambda shape: pl.BlockSpec(shape, lambda i: (0,) * len(shape))

    out = pl.pallas_call(
        functools.partial(mlp_kernel, sb=sb, elu_dtype=elu_dtype),
        out_shape=jax.ShapeDtypeStruct((rows_pad, Nq), jnp.float32),
        grid_spec=pltpu.PrefetchScalarGridSpec(
            num_scalar_prefetch=0,
            grid=(grid_b,),
            in_specs=[
                pl.BlockSpec((tile_rows, Kp), lambda i: (i, 0)),   # packed x tile
                full(w1p.shape), full(b1p.shape),
                full(w2p.shape), full(b2p.shape),
                full(w3p.shape), full(b3p.shape),
            ],
            out_specs=pl.BlockSpec((tile_rows, Nq), lambda i: (i, 0)),
        ),
        compiler_params=pltpu.CompilerParams(
            dimension_semantics=("parallel",),
            vmem_limit_bytes=vmem_limit,
        ),
        cost_estimate=cost,
    )(xp, w1p, b1p, w2p, b2p, w3p, b3p)

    y = out.reshape(rows_pad * R, Q)                       # un-pack the lanes
    return y[:B]


def init_params(key, num_temp, conv_input_size, hid1, hid2, q_num,
                *, weight_dtype=jnp.bfloat16):
    """Mimics the module's reinit(): uniform(-1/sqrt(fan_in), +1/sqrt(fan_in))
    for each layer's weight & bias.  Weights are stored [in, out] (transposed
    vs PyTorch) and cast to `weight_dtype` (bf16 halves HBM reads); biases f32.
    """
    d_in = num_temp + conv_input_size
    ks = jax.random.split(key, 6)

    def unif(k, shape, fan_in, dtype):
        lim = 1.0 / np.sqrt(fan_in)
        return jax.random.uniform(k, shape, jnp.float32, -lim, lim).astype(dtype)

    w1 = unif(ks[0], (d_in, hid1), d_in, weight_dtype)
    b1 = unif(ks[1], (1, hid1), d_in, jnp.float32)
    w2 = unif(ks[2], (hid1, hid2), hid1, weight_dtype)
    b2 = unif(ks[3], (1, hid2), hid1, jnp.float32)
    w3 = unif(ks[4], (hid2, q_num), hid2, weight_dtype)
    b3 = unif(ks[5], (1, q_num), hid2, jnp.float32)
    return w1, b1, w2, b2, w3, b3


def mlp_reference(x, w1, b1, w2, b2, w3, b3):
    """Pure-numpy f32 reference (expm1-based ELU), computed from the same
    (possibly bf16) parameter values the kernel sees."""
    f = lambda a: np.asarray(jnp.asarray(a, jnp.float32))

    def elu(v):
        return np.where(v > 0, v, np.expm1(v))

    h1 = elu(f(x) @ f(w1) + f(b1))
    h2 = elu(h1 @ f(w2) + f(b2))
    return h2 @ f(w3) + f(b3)


if __name__ == "__main__":
    # Small shapes consistent with the module:
    #   (num_temp + conv_input_size) -> mlp_hid_dim1 -> mlp_hid_dim2 -> q_num
    num_temp = 8
    conv_input_size = 24        # D_in = 32
    hid1 = 32
    hid2 = 32
    q_num = 4                   # e.g. params.q = 4 -> q = [0.2, 0.4, 0.6, 0.8]
    batch = 8                   # demo size; the packing/tiling pays off at large B

    key = jax.random.PRNGKey(0)
    kx, kp = jax.random.split(key)
    x = jax.random.normal(kx, (batch, num_temp + conv_input_size),
                          jnp.float32).astype(jnp.bfloat16)
    w1, b1, w2, b2, w3, b3 = init_params(kp, num_temp, conv_input_size,
                                         hid1, hid2, q_num)

    out = mlp_forward(x, w1, b1, w2, b2, w3, b3)
    out = jax.block_until_ready(out)
    assert out.shape == (batch, q_num) and out.dtype == jnp.float32

    ref = mlp_reference(x, w1, b1, w2, b2, w3, b3)
    # The kernel rounds h1/h2 to bf16 between layers (and may run ELU in bf16);
    # allow a couple of bf16 ulps of slack vs the f32 reference.
    np.testing.assert_allclose(np.asarray(out), ref, rtol=2e-2, atol=3e-2)

    print("KERNEL_OK")
</pallas_src>

<mosaic_0001>
module attributes {stable_mosaic.version = 11 : i64} {
  func.func @mlp_kernel(%arg0: i32, %arg1: memref<8x256xbf16, #tpu.memory_space<vmem>>, %arg2: memref<256x256xbf16, #tpu.memory_space<vmem>>, %arg3: memref<1x256xf32, #tpu.memory_space<vmem>>, %arg4: memref<256x256xbf16, #tpu.memory_space<vmem>>, %arg5: memref<1x256xf32, #tpu.memory_space<vmem>>, %arg6: memref<256x32xbf16, #tpu.memory_space<vmem>>, %arg7: memref<1x32xf32, #tpu.memory_space<vmem>>, %arg8: memref<8x32xf32, #tpu.memory_space<vmem>>) attributes {dimension_semantics = [#tpu.dimension_semantics<parallel>], iteration_bounds = array<i64: 1>, scalar_prefetch = 0 : i64, scratch_operands = 0 : i64, tpu.core_type = #tpu.core_type<tc>, window_params = [{transform_indices = @transform_0, window_bounds = array<i64: 8, 256>}, {pipeline_mode = #tpu.pipeline_mode<synchronous>, transform_indices = @transform_1, window_bounds = array<i64: 256, 256>}, {pipeline_mode = #tpu.pipeline_mode<synchronous>, transform_indices = @transform_2, window_bounds = array<i64: 1, 256>}, {pipeline_mode = #tpu.pipeline_mode<synchronous>, transform_indices = @transform_3, window_bounds = array<i64: 256, 256>}, {pipeline_mode = #tpu.pipeline_mode<synchronous>, transform_indices = @transform_4, window_bounds = array<i64: 1, 256>}, {pipeline_mode = #tpu.pipeline_mode<synchronous>, transform_indices = @transform_5, window_bounds = array<i64: 256, 32>}, {pipeline_mode = #tpu.pipeline_mode<synchronous>, transform_indices = @transform_6, window_bounds = array<i64: 1, 32>}, {transform_indices = @transform_7, window_bounds = array<i64: 8, 32>}]} {
    %c0 = arith.constant 0 : index
    %c0_0 = arith.constant 0 : index
    %0 = vector.load %arg3[%c0, %c0_0] : memref<1x256xf32, #tpu.memory_space<vmem>>, vector<1x256xf32>
    %c0_1 = arith.constant 0 : index
    %c0_2 = arith.constant 0 : index
    %1 = vector.load %arg5[%c0_1, %c0_2] : memref<1x256xf32, #tpu.memory_space<vmem>>, vector<1x256xf32>
    %c0_3 = arith.constant 0 : index
    %c0_4 = arith.constant 0 : index
    %2 = vector.load %arg7[%c0_3, %c0_4] : memref<1x32xf32, #tpu.memory_space<vmem>>, vector<1x32xf32>
    %c0_5 = arith.constant 0 : index
    %c0_6 = arith.constant 0 : index
    %3 = vector.load %arg1[%c0_5, %c0_6] : memref<8x256xbf16, #tpu.memory_space<vmem>>, vector<8x256xbf16>
    %c0_7 = arith.constant 0 : index
    %c0_8 = arith.constant 0 : index
    %4 = vector.load %arg2[%c0_7, %c0_8] : memref<256x256xbf16, #tpu.memory_space<vmem>>, vector<256x256xbf16>
    %cst = arith.constant dense<0.000000e+00> : vector<8x256xf32>
    %5 = tpu.matmul %3, %4, %cst {dimension_numbers = #tpu.dot_dimension_numbers<[1], [0], [0], [1], [0, 0, 1, 1], [], []>} : vector<8x256xbf16>, vector<256x256xbf16>, vector<8x256xf32> -> vector<8x256xf32>
    %6 = vector.broadcast %0 : vector<1x256xf32> to vector<8x256xf32>
    %7 = arith.addf %5, %6 : vector<8x256xf32>
    %8 = arith.truncf %7 : vector<8x256xf32> to vector<8x256xbf16>
    %cst_9 = arith.constant 0.000000e+00 : bf16
    %9 = vector.broadcast %cst_9 : bf16 to vector<8x256xbf16>
    %10 = arith.cmpf ogt, %8, %9 : vector<8x256xbf16>
    %11 = math.exp %8 : vector<8x256xbf16>
    %cst_10 = arith.constant 1.000000e+00 : bf16
    %12 = vector.broadcast %cst_10 : bf16 to vector<8x256xbf16>
    %13 = arith.subf %11, %12 : vector<8x256xbf16>
    %14 = arith.select %10, %8, %13 : vector<8x256xi1>, vector<8x256xbf16>
    %c0_11 = arith.constant 0 : index
    %c0_12 = arith.constant 0 : index
    %15 = vector.load %arg4[%c0_11, %c0_12] : memref<256x256xbf16, #tpu.memory_space<vmem>>, vector<256x256xbf16>
    %cst_13 = arith.constant dense<0.000000e+00> : vector<8x256xf32>
    %16 = tpu.matmul %14, %15, %cst_13 {dimension_numbers = #tpu.dot_dimension_numbers<[1], [0], [0], [1], [0, 0, 1, 1], [], []>} : vector<8x256xbf16>, vector<256x256xbf16>, vector<8x256xf32> -> vector<8x256xf32>
    %17 = vector.broadcast %1 : vector<1x256xf32> to vector<8x256xf32>
    %18 = arith.addf %16, %17 : vector<8x256xf32>
    %19 = arith.truncf %18 : vector<8x256xf32> to vector<8x256xbf16>
    %cst_14 = arith.constant 0.000000e+00 : bf16
    %20 = vector.broadcast %cst_14 : bf16 to vector<8x256xbf16>
    %21 = arith.cmpf ogt, %19, %20 : vector<8x256xbf16>
    %22 = math.exp %19 : vector<8x256xbf16>
    %cst_15 = arith.constant 1.000000e+00 : bf16
    %23 = vector.broadcast %cst_15 : bf16 to vector<8x256xbf16>
    %24 = arith.subf %22, %23 : vector<8x256xbf16>
    %25 = arith.select %21, %19, %24 : vector<8x256xi1>, vector<8x256xbf16>
    %c0_16 = arith.constant 0 : index
    %c0_17 = arith.constant 0 : index
    %26 = vector.load %arg6[%c0_16, %c0_17] : memref<256x32xbf16, #tpu.memory_space<vmem>>, vector<256x32xbf16>
    %cst_18 = arith.constant dense<0.000000e+00> : vector<8x32xf32>
    %27 = tpu.matmul %25, %26, %cst_18 {dimension_numbers = #tpu.dot_dimension_numbers<[1], [0], [0], [1], [0, 0, 1, 1], [], []>} : vector<8x256xbf16>, vector<256x32xbf16>, vector<8x32xf32> -> vector<8x32xf32>
    %28 = vector.broadcast %2 : vector<1x32xf32> to vector<8x32xf32>
    %29 = arith.addf %27, %28 : vector<8x32xf32>
    %c0_19 = arith.constant 0 : index
    %c0_20 = arith.constant 0 : index
    %30 = vector.load %arg8[%c0_19, %c0_20] : memref<8x32xf32, #tpu.memory_space<vmem>>, vector<8x32xf32>
    tpu.vector_store %arg8[%c0_19, %c0_20], %29 {strides = array<i32>} : memref<8x32xf32, #tpu.memory_space<vmem>>, vector<8x32xf32>,
    return
  }
  func.func @transform_0(%arg0: i32) -> (i32, i32) {
    %c0_i32 = arith.constant 0 : i32
    %c0_i32_0 = arith.constant 0 : i32
    return %arg0, %c0_i32 : i32, i32
  }
  func.func @transform_1(%arg0: i32) -> (i32, i32) {
    %c0_i32 = arith.constant 0 : i32
    %c0_i32_0 = arith.constant 0 : i32
    %c0_i32_1 = arith.constant 0 : i32
    return %c0_i32, %c0_i32_0 : i32, i32
  }
  func.func @transform_2(%arg0: i32) -> (i32, i32) {
    %c0_i32 = arith.constant 0 : i32
    %c0_i32_0 = arith.constant 0 : i32
    %c0_i32_1 = arith.constant 0 : i32
    return %c0_i32, %c0_i32_0 : i32, i32
  }
  func.func @transform_3(%arg0: i32) -> (i32, i32) {
    %c0_i32 = arith.constant 0 : i32
    %c0_i32_0 = arith.constant 0 : i32
    %c0_i32_1 = arith.constant 0 : i32
    return %c0_i32, %c0_i32_0 : i32, i32
  }
  func.func @transform_4(%arg0: i32) -> (i32, i32) {
    %c0_i32 = arith.constant 0 : i32
    %c0_i32_0 = arith.constant 0 : i32
    %c0_i32_1 = arith.constant 0 : i32
    return %c0_i32, %c0_i32_0 : i32, i32
  }
  func.func @transform_5(%arg0: i32) -> (i32, i32) {
    %c0_i32 = arith.constant 0 : i32
    %c0_i32_0 = arith.constant 0 : i32
    %c0_i32_1 = arith.constant 0 : i32
    return %c0_i32, %c0_i32_0 : i32, i32
  }
  func.func @transform_6(%arg0: i32) -> (i32, i32) {
    %c0_i32 = arith.constant 0 : i32
    %c0_i32_0 = arith.constant 0 : i32
    %c0_i32_1 = arith.constant 0 : i32
    return %c0_i32, %c0_i32_0 : i32, i32
  }
  func.func @transform_7(%arg0: i32) -> (i32, i32) {
    %c0_i32 = arith.constant 0 : i32
    %c0_i32_0 = arith.constant 0 : i32
    return %arg0, %c0_i32 : i32, i32
  }
}

</mosaic_0001>

<llo_original>
// kernel: tpu_custom_call.1
$region0: #{tpu_custom_call.1}
  #allocation0 [shape = 'u32[]', space=smem, size = 0x4, offset = 0x4, fixed_abs, tag = 'smem constant byte address 0x4 - core index']
  #allocation1 [shape = 'u32[144,128]{1,0:T(1,128)}', space=vmem, size = 0x12000, scoped, tag = 'internal scratch']
  %s0 = inlined_call_operand.vmem [shape: bf16[8,256], index: 0, kind: input, shape index: {}]
  %s1 = inlined_call_operand.hbm [shape: bf16[256,256], index: 1, kind: input, shape index: {}]
  %s2 = inlined_call_operand.vmem [shape: f32[1,256], index: 2, kind: input, shape index: {}]
  %s3 = inlined_call_operand.hbm [shape: bf16[256,256], index: 3, kind: input, shape index: {}]
  %s4 = inlined_call_operand.vmem [shape: f32[1,256], index: 4, kind: input, shape index: {}]
  %s5 = inlined_call_operand.vmem [shape: bf16[256,32], index: 5, kind: input, shape index: {}]
  %s6 = inlined_call_operand.vmem [shape: f32[1,32], index: 6, kind: input, shape index: {}]
  %s7 = inlined_call_operand.hbm [shape: f32[8,32], index: 7, kind: output, shape index: {}]
  %s8 = sld [smem:[#allocation0]]
  $region46: #{tpu_custom_call.1} parent=0
    _
  %s10 = ssub.s32 1, %s8
  %s11 = scalar_select 0, %s10, %s8
  $region1: #{tpu_custom_call.1} parent=0
    #allocation2 [shape = 'u8[131072]{0}', space=vmem, size = 0x20000, scoped, tag = 'input window, operand 1, single buffered']
    #allocation3 [shape = 's32[1]{0}', space=sflag, size = 0x4, scoped, tag = 'scoped memory for tpu_custom_call.1']
    #allocation4 [shape = 's32[1]{0}', space=sflag, size = 0x4, scoped, tag = 'scoped memory for tpu_custom_call.1']
    #allocation5 [shape = 'u8[131072]{0}', space=vmem, size = 0x20000, scoped, tag = 'input window, operand 3, single buffered']
    #allocation6 [shape = 's32[1]{0}', space=sflag, size = 0x4, scoped, tag = 'scoped memory for tpu_custom_call.1']
    #allocation7 [shape = 'u8[4096]{0}', space=vmem, size = 0x1000, scoped, tag = 'output window, operand 0, single buffered']
    %12 = vsyncpa [#allocation3], 0
    %13 = vsyncpa [#allocation6], 0
    %14 = vsyncpa [#allocation4], 0
    // Predicated region
    $region2: #{tpu_custom_call.1} parent=1 // pred_check
      _
    $region3: #{tpu_custom_call.1} parent=1 // pred_check_branch
      %16 = sbr.rel (0) target = $region5
    $region4: #{tpu_custom_call.1} parent=1 // pred_region
      _
    $region5: #{tpu_custom_call.1} parent=1 // pred_fallthru
      _
    // Predicated region
    $region6: #{tpu_custom_call.1} parent=1 // pred_check
      _
    $region7: #{tpu_custom_call.1} parent=1 // pred_check_branch
      %18 = sbr.rel (0) target = $region9
    $region8: #{tpu_custom_call.1} parent=1 // pred_region
      %s20 = ssub.s32 4096, 4096
      %21 = vsyncadd [#allocation3], %s20
      %s22 = sshll.u32 [#allocation2], 4
      %s23 = int_to_ptr.vmem [resolvable:$true] %s22
      %28 = dma.hbm_to_vmem [thread:$0]  %s1, 4096, %s23, [#allocation3], 128, 128, 8
    $region9: #{tpu_custom_call.1} parent=1 // pred_fallthru
      _
    // Predicated region
    $region10: #{tpu_custom_call.1} parent=1 // pred_check
      _
    $region11: #{tpu_custom_call.1} parent=1 // pred_check_branch
      %30 = sbr.rel (0) target = $region13
    $region12: #{tpu_custom_call.1} parent=1 // pred_region
      _
    $region13: #{tpu_custom_call.1} parent=1 // pred_fallthru
      _
    // Predicated region
    $region14: #{tpu_custom_call.1} parent=1 // pred_check
      _
    $region15: #{tpu_custom_call.1} parent=1 // pred_check_branch
      %32 = sbr.rel (0) target = $region17
    $region16: #{tpu_custom_call.1} parent=1 // pred_region
      %s34 = ssub.s32 4096, 4096
      %35 = vsyncadd [#allocation6], %s34
      %s36 = sshll.u32 [#allocation5], 4
      %s37 = int_to_ptr.vmem [resolvable:$true] %s36
      %42 = dma.hbm_to_vmem [thread:$0]  %s3, 4096, %s37, [#allocation6], 128, 128, 8
    $region17: #{tpu_custom_call.1} parent=1 // pred_fallthru
      _
    // Predicated region
    $region18: #{tpu_custom_call.1} parent=1 // pred_check
      _
    $region19: #{tpu_custom_call.1} parent=1 // pred_check_branch
      %44 = sbr.rel (0) target = $region21
    $region20: #{tpu_custom_call.1} parent=1 // pred_region
      _
    $region21: #{tpu_custom_call.1} parent=1 // pred_fallthru
      _
    // Predicated region
    $region22: #{tpu_custom_call.1} parent=1 // pred_check
      _
    $region23: #{tpu_custom_call.1} parent=1 // pred_check_branch
      %46 = sbr.rel (0) target = $region25
    $region24: #{tpu_custom_call.1} parent=1 // pred_region
      _
    $region25: #{tpu_custom_call.1} parent=1 // pred_fallthru
      _
    // Predicated region
    $region26: #{tpu_custom_call.1} parent=1 // pred_check
      _
    $region27: #{tpu_custom_call.1} parent=1 // pred_check_branch
      %48 = sbr.rel (0) target = $region29
    $region28: #{tpu_custom_call.1} parent=1 // pred_region
      _
    $region29: #{tpu_custom_call.1} parent=1 // pred_fallthru
      _
    // Predicated region
    $region30: #{tpu_custom_call.1} parent=1 // pred_check
      _
    $region31: #{tpu_custom_call.1} parent=1 // pred_check_branch
      %50 = sbr.rel (0) target = $region33
    $region32: #{tpu_custom_call.1} parent=1 // pred_region
      %51 = dma.done [#allocation3], 4096
    $region33: #{tpu_custom_call.1} parent=1 // pred_fallthru
      _
    // Predicated region
    $region34: #{tpu_custom_call.1} parent=1 // pred_check
      _
    $region35: #{tpu_custom_call.1} parent=1 // pred_check_branch
      %53 = sbr.rel (0) target = $region37
    $region36: #{tpu_custom_call.1} parent=1 // pred_region
      %54 = dma.done [#allocation6], 4096
    $region37: #{tpu_custom_call.1} parent=1 // pred_fallthru
      _
    %v57 = vld [vmem:[%s2] sm:$0x3]
    %v58 = vld [vmem:[%s4] sm:$0x3]
    %v59 = vld [vmem:[%s6] sm:$0x1]
    %v60 = vld [vmem:[%s0] sm:$0xff]
    %v61 = vld [vmem:[#allocation2] sm:$0xff]
    %v62 = vld [vmem:[#allocation2 + $0x8] sm:$0xff]
    %v63 = vld [vmem:[#allocation2 + $0x10] sm:$0xff]
    %v64 = vld [vmem:[#allocation2 + $0x18] sm:$0xff]
    %v65 = vld [vmem:[#allocation2 + $0x20] sm:$0xff]
    %v66 = vld [vmem:[#allocation2 + $0x28] sm:$0xff]
    %v67 = vld [vmem:[#allocation2 + $0x30] sm:$0xff]
    %v68 = vld [vmem:[#allocation2 + $0x38] sm:$0xff]
    %v69 = vld [vmem:[#allocation2 + $0x40] sm:$0xff]
    %v70 = vld [vmem:[#allocation2 + $0x48] sm:$0xff]
    %v71 = vld [vmem:[#allocation2 + $0x50] sm:$0xff]
    %v72 = vld [vmem:[#allocation2 + $0x58] sm:$0xff]
    %v73 = vld [vmem:[#allocation2 + $0x60] sm:$0xff]
    %v74 = vld [vmem:[#allocation2 + $0x68] sm:$0xff]
    %v75 = vld [vmem:[#allocation2 + $0x70] sm:$0xff]
    %v76 = vld [vmem:[#allocation2 + $0x78] sm:$0xff]
    %v77 = vld [vmem:[#allocation2 + $0x80] sm:$0xff]
    %v78 = vld [vmem:[#allocation2 + $0x88] sm:$0xff]
    %v79 = vld [vmem:[#allocation2 + $0x90] sm:$0xff]
    %v80 = vld [vmem:[#allocation2 + $0x98] sm:$0xff]
    %v81 = vld [vmem:[#allocation2 + $0xa0] sm:$0xff]
    %v82 = vld [vmem:[#allocation2 + $0xa8] sm:$0xff]
    %v83 = vld [vmem:[#allocation2 + $0xb0] sm:$0xff]
    %v84 = vld [vmem:[#allocation2 + $0xb8] sm:$0xff]
    %v85 = vld [vmem:[#allocation2 + $0xc0] sm:$0xff]
    %v86 = vld [vmem:[#allocation2 + $0xc8] sm:$0xff]
    %v87 = vld [vmem:[#allocation2 + $0xd0] sm:$0xff]
    %v88 = vld [vmem:[#allocation2 + $0xd8] sm:$0xff]
    %v89 = vld [vmem:[#allocation2 + $0xe0] sm:$0xff]
    %v90 = vld [vmem:[#allocation2 + $0xe8] sm:$0xff]
    %v91 = vld [vmem:[#allocation2 + $0xf0] sm:$0xff]
    %v92 = vld [vmem:[#allocation2 + $0xf8] sm:$0xff]
    %v94 = vlaneseq
    %v95 = vshrl.u32 %v94, 7
    %v96 = vsub.s32 0, %v95
    %v97 = vrot.slane %v57, %v96
    %v98 = vlaneseq
    %v99 = vshrl.u32 %v98, 7
    %v100 = vsub.s32 1, %v99
    %v101 = vrot.slane %v57, %v100
    %v105 = vunpack.c.l.b16 %v60
    %v106 = vunpack.c.h.b16 %v60
    %v107 = vpack.c.b16 %v105, %v105
    %v108 = vpack.c.b16 %v106, %v106
    %v143 = vunpack.c.l.b16 %v61
    %v144 = vunpack.c.h.b16 %v61
    %v145 = vunpack.c.l.b16 %v62
    %v146 = vunpack.c.h.b16 %v62
    %v147 = vunpack.c.l.b16 %v63
    %v148 = vunpack.c.h.b16 %v63
    %v149 = vunpack.c.l.b16 %v64
    %v150 = vunpack.c.h.b16 %v64
    %v151 = vunpack.c.l.b16 %v65
    %v152 = vunpack.c.h.b16 %v65
    %v153 = vunpack.c.l.b16 %v66
    %v154 = vunpack.c.h.b16 %v66
    %v155 = vunpack.c.l.b16 %v67
    %v156 = vunpack.c.h.b16 %v67
    %v157 = vunpack.c.l.b16 %v68
    %v158 = vunpack.c.h.b16 %v68
    %v159 = vunpack.c.l.b16 %v69
    %v160 = vunpack.c.h.b16 %v69
    %v161 = vunpack.c.l.b16 %v70
    %v162 = vunpack.c.h.b16 %v70
    %v163 = vunpack.c.l.b16 %v71
    %v164 = vunpack.c.h.b16 %v71
    %v165 = vunpack.c.l.b16 %v72
    %v166 = vunpack.c.h.b16 %v72
    %v167 = vunpack.c.l.b16 %v73
    %v168 = vunpack.c.h.b16 %v73
    %v169 = vunpack.c.l.b16 %v74
    %v170 = vunpack.c.h.b16 %v74
    %v171 = vunpack.c.l.b16 %v75
    %v172 = vunpack.c.h.b16 %v75
    %v173 = vunpack.c.l.b16 %v76
    %v174 = vunpack.c.h.b16 %v76
    %v175 = vunpack.c.l.b16 %v77
    %v176 = vunpack.c.h.b16 %v77
    %v177 = vunpack.c.l.b16 %v78
    %v178 = vunpack.c.h.b16 %v78
    %v179 = vunpack.c.l.b16 %v79
    %v180 = vunpack.c.h.b16 %v79
    %v181 = vunpack.c.l.b16 %v80
    %v182 = vunpack.c.h.b16 %v80
    %v183 = vunpack.c.l.b16 %v81
    %v184 = vunpack.c.h.b16 %v81
    %v185 = vunpack.c.l.b16 %v82
    %v186 = vunpack.c.h.b16 %v82
    %v187 = vunpack.c.l.b16 %v83
    %v188 = vunpack.c.h.b16 %v83
    %v189 = vunpack.c.l.b16 %v84
    %v190 = vunpack.c.h.b16 %v84
    %v191 = vunpack.c.l.b16 %v85
    %v192 = vunpack.c.h.b16 %v85
    %v193 = vunpack.c.l.b16 %v86
    %v194 = vunpack.c.h.b16 %v86
    %v195 = vunpack.c.l.b16 %v87
    %v196 = vunpack.c.h.b16 %v87
    %v197 = vunpack.c.l.b16 %v88
    %v198 = vunpack.c.h.b16 %v88
    %v199 = vunpack.c.l.b16 %v89
    %v200 = vunpack.c.h.b16 %v89
    %v201 = vunpack.c.l.b16 %v90
    %v202 = vunpack.c.h.b16 %v90
    %v203 = vunpack.c.l.b16 %v91
    %v204 = vunpack.c.h.b16 %v91
    %v205 = vunpack.c.l.b16 %v92
    %v206 = vunpack.c.h.b16 %v92
    %v207 = vpack.c.b16 %v145, %v143
    %v208 = vpack.c.b16 %v146, %v144
    %v209 = vpack.c.b16 %v149, %v147
    %v210 = vpack.c.b16 %v150, %v148
    %v211 = vpack.c.b16 %v153, %v151
    %v212 = vpack.c.b16 %v154, %v152
    %v213 = vpack.c.b16 %v157, %v155
    %v214 = vpack.c.b16 %v158, %v156
    %v215 = vpack.c.b16 %v161, %v159
    %v216 = vpack.c.b16 %v162, %v160
    %v217 = vpack.c.b16 %v165, %v163
    %v218 = vpack.c.b16 %v166, %v164
    %v219 = vpack.c.b16 %v169, %v167
    %v220 = vpack.c.b16 %v170, %v168
    %v221 = vpack.c.b16 %v173, %v171
    %v222 = vpack.c.b16 %v174, %v172
    %v223 = vpack.c.b16 %v177, %v175
    %v224 = vpack.c.b16 %v178, %v176
    %v225 = vpack.c.b16 %v181, %v179
    %v226 = vpack.c.b16 %v182, %v180
    %v227 = vpack.c.b16 %v185, %v183
    %v228 = vpack.c.b16 %v186, %v184
    %v229 = vpack.c.b16 %v189, %v187
    %v230 = vpack.c.b16 %v190, %v188
    %v231 = vpack.c.b16 %v193, %v191
    %v232 = vpack.c.b16 %v194, %v192
    %v233 = vpack.c.b16 %v197, %v195
    %v234 = vpack.c.b16 %v198, %v196
    %v235 = vpack.c.b16 %v201, %v199
    %v236 = vpack.c.b16 %v202, %v200
    %v237 = vpack.c.b16 %v205, %v203
    %v238 = vpack.c.b16 %v206, %v204
    %271 = vmatprep.subr.bf16.mxu0 %v222
    %272 = vmatpush1.bf16.msra.mxu0 %v221
    %273 = vmatprep.subr.bf16.mxu0 %v220
    %274 = vmatpush1.bf16.msra.mxu0 %v219
    %275 = vmatprep.subr.bf16.mxu0 %v218
    %276 = vmatpush1.bf16.msra.mxu0 %v217
    %277 = vmatprep.subr.bf16.mxu0 %v216
    %278 = vmatpush1.bf16.msra.mxu0 %v215
    %279 = vmatprep.subr.bf16.mxu0 %v214
    %280 = vmatpush1.bf16.msra.mxu0 %v213
    %281 = vmatprep.subr.bf16.mxu0 %v212
    %282 = vmatpush1.bf16.msra.mxu0 %v211
    %283 = vmatprep.subr.bf16.mxu0 %v210
    %284 = vmatpush1.bf16.msra.mxu0 %v209
    %285 = vmatprep.subr.bf16.mxu0 %v208
    %286 = vmatpush1.bf16.msra.mxu0 %v207
    %287 = vmatprep.subr.bf16.mxu0 %v238
    %288 = vmatpush2.bf16.msra.mxu0 %v237
    %289 = vmatprep.subr.bf16.mxu0 %v236
    %290 = vmatpush2.bf16.msra.mxu0 %v235
    %291 = vmatprep.subr.bf16.mxu0 %v234
    %292 = vmatpush2.bf16.msra.mxu0 %v233
    %293 = vmatprep.subr.bf16.mxu0 %v232
    %294 = vmatpush2.bf16.msra.mxu0 %v231
    %295 = vmatprep.subr.bf16.mxu0 %v230
    %296 = vmatpush2.bf16.msra.mxu0 %v229
    %297 = vmatprep.subr.bf16.mxu0 %v228
    %298 = vmatpush2.bf16.msra.mxu0 %v227
    %299 = vmatprep.subr.bf16.mxu0 %v226
    %300 = vmatpush2.bf16.msra.mxu0 %v225
    %301 = vmatprep.subr.bf16.mxu0 %v224
    %302 = vmatpush2.bf16.msra.mxu0 %v223
    %303 = vmatprep.mubr.bf16.mxu0 %v108
    %304 = vmatmul.mubr.bf16.gmra.mxu0 %v107
    %v305 = vpop.f32.mrf.mxu0
    %v306 = vadd.f32 %v97, %v305
    %v307 = vpop.f32.mrf.mxu0
    %v308 = vadd.f32 %v101, %v307
    %v309 = vpop.f32.mrf.mxu0
    %v310 = vpop.f32.mrf.mxu0
    %311 = vdwg.mxu0
    %v312 = vpack.c.bf16 %v306, %v306
    %v313 = vpack.c.bf16 %v308, %v308
    %vm314 = vcmp.gt.bf16.partialorder %v312, 0
    %vm315 = vcmp.gt.bf16.partialorder %v313, 0
    %v317 = vmul.bf16 %v312, 1069105081
    %v318 = vpow.bf16.pop %v317
    %v320 = vmul.bf16 %v313, 1069105081
    %v321 = vpow.bf16.pop %v320
    %v322 = vsub.bf16 %v318, 1065369472
    %v323 = vsub.bf16 %v321, 1065369472
    %v324 = vsel %vm314, %v312, %v322
    %v325 = vsel %vm315, %v313, %v323
    %v326 = vld [vmem:[#allocation5] sm:$0xff]
    %v327 = vld [vmem:[#allocation5 + $0x8] sm:$0xff]
    %v328 = vld [vmem:[#allocation5 + $0x10] sm:$0xff]
    %v329 = vld [vmem:[#allocation5 + $0x18] sm:$0xff]
    %v330 = vld [vmem:[#allocation5 + $0x20] sm:$0xff]
    %v331 = vld [vmem:[#allocation5 + $0x28] sm:$0xff]
    %v332 = vld [vmem:[#allocation5 + $0x30] sm:$0xff]
    %v333 = vld [vmem:[#allocation5 + $0x38] sm:$0xff]
    %v334 = vld [vmem:[#allocation5 + $0x40] sm:$0xff]
    %v335 = vld [vmem:[#allocation5 + $0x48] sm:$0xff]
    %v336 = vld [vmem:[#allocation5 + $0x50] sm:$0xff]
    %v337 = vld [vmem:[#allocation5 + $0x58] sm:$0xff]
    %v338 = vld [vmem:[#allocation5 + $0x60] sm:$0xff]
    %v339 = vld [vmem:[#allocation5 + $0x68] sm:$0xff]
    %v340 = vld [vmem:[#allocation5 + $0x70] sm:$0xff]
    %v341 = vld [vmem:[#allocation5 + $0x78] sm:$0xff]
    %v342 = vld [vmem:[#allocation5 + $0x80] sm:$0xff]
    %v343 = vld [vmem:[#allocation5 + $0x88] sm:$0xff]
    %v344 = vld [vmem:[#allocation5 + $0x90] sm:$0xff]
    %v345 = vld [vmem:[#allocation5 + $0x98] sm:$0xff]
    %v346 = vld [vmem:[#allocation5 + $0xa0] sm:$0xff]
    %v347 = vld [vmem:[#allocation5 + $0xa8] sm:$0xff]
    %v348 = vld [vmem:[#allocation5 + $0xb0] sm:$0xff]
    %v349 = vld [vmem:[#allocation5 + $0xb8] sm:$0xff]
    %v350 = vld [vmem:[#allocation5 + $0xc0] sm:$0xff]
    %v351 = vld [vmem:[#allocation5 + $0xc8] sm:$0xff]
    %v352 = vld [vmem:[#allocation5 + $0xd0] sm:$0xff]
    %v353 = vld [vmem:[#allocation5 + $0xd8] sm:$0xff]
    %v354 = vld [vmem:[#allocation5 + $0xe0] sm:$0xff]
    %v355 = vld [vmem:[#allocation5 + $0xe8] sm:$0xff]
    %v356 = vld [vmem:[#allocation5 + $0xf0] sm:$0xff]
    %v357 = vld [vmem:[#allocation5 + $0xf8] sm:$0xff]
    %v359 = vlaneseq
    %v360 = vshrl.u32 %v359, 7
    %v361 = vsub.s32 0, %v360
    %v362 = vrot.slane %v58, %v361
    %v363 = vlaneseq
    %v364 = vshrl.u32 %v363, 7
    %v365 = vsub.s32 1, %v364
    %v366 = vrot.slane %v58, %v365
    %v401 = vunpack.c.l.b16 %v326
    %v402 = vunpack.c.h.b16 %v326
    %v403 = vunpack.c.l.b16 %v327
    %v404 = vunpack.c.h.b16 %v327
    %v405 = vunpack.c.l.b16 %v328
    %v406 = vunpack.c.h.b16 %v328
    %v407 = vunpack.c.l.b16 %v329
    %v408 = vunpack.c.h.b16 %v329
    %v409 = vunpack.c.l.b16 %v330
    %v410 = vunpack.c.h.b16 %v330
    %v411 = vunpack.c.l.b16 %v331
    %v412 = vunpack.c.h.b16 %v331
    %v413 = vunpack.c.l.b16 %v332
    %v414 = vunpack.c.h.b16 %v332
    %v415 = vunpack.c.l.b16 %v333
    %v416 = vunpack.c.h.b16 %v333
    %v417 = vunpack.c.l.b16 %v334
    %v418 = vunpack.c.h.b16 %v334
    %v419 = vunpack.c.l.b16 %v335
    %v420 = vunpack.c.h.b16 %v335
    %v421 = vunpack.c.l.b16 %v336
    %v422 = vunpack.c.h.b16 %v336
    %v423 = vunpack.c.l.b16 %v337
    %v424 = vunpack.c.h.b16 %v337
    %v425 = vunpack.c.l.b16 %v338
    %v426 = vunpack.c.h.b16 %v338
    %v427 = vunpack.c.l.b16 %v339
    %v428 = vunpack.c.h.b16 %v339
    %v429 = vunpack.c.l.b16 %v340
    %v430 = vunpack.c.h.b16 %v340
    %v431 = vunpack.c.l.b16 %v341
    %v432 = vunpack.c.h.b16 %v341
    %v433 = vunpack.c.l.b16 %v342
    %v434 = vunpack.c.h.b16 %v342
    %v435 = vunpack.c.l.b16 %v343
    %v436 = vunpack.c.h.b16 %v343
    %v437 = vunpack.c.l.b16 %v344
    %v438 = vunpack.c.h.b16 %v344
    %v439 = vunpack.c.l.b16 %v345
    %v440 = vunpack.c.h.b16 %v345
    %v441 = vunpack.c.l.b16 %v346
    %v442 = vunpack.c.h.b16 %v346
    %v443 = vunpack.c.l.b16 %v347
    %v444 = vunpack.c.h.b16 %v347
    %v445 = vunpack.c.l.b16 %v348
    %v446 = vunpack.c.h.b16 %v348
    %v447 = vunpack.c.l.b16 %v349
    %v448 = vunpack.c.h.b16 %v349
    %v449 = vunpack.c.l.b16 %v350
    %v450 = vunpack.c.h.b16 %v350
    %v451 = vunpack.c.l.b16 %v351
    %v452 = vunpack.c.h.b16 %v351
    %v453 = vunpack.c.l.b16 %v352
    %v454 = vunpack.c.h.b16 %v352
    %v455 = vunpack.c.l.b16 %v353
    %v456 = vunpack.c.h.b16 %v353
    %v457 = vunpack.c.l.b16 %v354
    %v458 = vunpack.c.h.b16 %v354
    %v459 = vunpack.c.l.b16 %v355
    %v460 = vunpack.c.h.b16 %v355
    %v461 = vunpack.c.l.b16 %v356
    %v462 = vunpack.c.h.b16 %v356
    %v463 = vunpack.c.l.b16 %v357
    %v464 = vunpack.c.h.b16 %v357
    %v465 = vpack.c.b16 %v403, %v401
    %v466 = vpack.c.b16 %v404, %v402
    %v467 = vpack.c.b16 %v407, %v405
    %v468 = vpack.c.b16 %v408, %v406
    %v469 = vpack.c.b16 %v411, %v409
    %v470 = vpack.c.b16 %v412, %v410
    %v471 = vpack.c.b16 %v415, %v413
    %v472 = vpack.c.b16 %v416, %v414
    %v473 = vpack.c.b16 %v419, %v417
    %v474 = vpack.c.b16 %v420, %v418
    %v475 = vpack.c.b16 %v423, %v421
    %v476 = vpack.c.b16 %v424, %v422
    %v477 = vpack.c.b16 %v427, %v425
    %v478 = vpack.c.b16 %v428, %v426
    %v479 = vpack.c.b16 %v431, %v429
    %v480 = vpack.c.b16 %v432, %v430
    %v481 = vpack.c.b16 %v435, %v433
    %v482 = vpack.c.b16 %v436, %v434
    %v483 = vpack.c.b16 %v439, %v437
    %v484 = vpack.c.b16 %v440, %v438
    %v485 = vpack.c.b16 %v443, %v441
    %v486 = vpack.c.b16 %v444, %v442
    %v487 = vpack.c.b16 %v447, %v445
    %v488 = vpack.c.b16 %v448, %v446
    %v489 = vpack.c.b16 %v451, %v449
    %v490 = vpack.c.b16 %v452, %v450
    %v491 = vpack.c.b16 %v455, %v453
    %v492 = vpack.c.b16 %v456, %v454
    %v493 = vpack.c.b16 %v459, %v457
    %v494 = vpack.c.b16 %v460, %v458
    %v495 = vpack.c.b16 %v463, %v461
    %v496 = vpack.c.b16 %v464, %v462
    %529 = vmatprep.subr.bf16.mxu0 %v480
    %530 = vmatpush1.bf16.msra.mxu0 %v479
    %531 = vmatprep.subr.bf16.mxu0 %v478
    %532 = vmatpush1.bf16.msra.mxu0 %v477
    %533 = vmatprep.subr.bf16.mxu0 %v476
    %534 = vmatpush1.bf16.msra.mxu0 %v475
    %535 = vmatprep.subr.bf16.mxu0 %v474
    %536 = vmatpush1.bf16.msra.mxu0 %v473
    %537 = vmatprep.subr.bf16.mxu0 %v472
    %538 = vmatpush1.bf16.msra.mxu0 %v471
    %539 = vmatprep.subr.bf16.mxu0 %v470
    %540 = vmatpush1.bf16.msra.mxu0 %v469
    %541 = vmatprep.subr.bf16.mxu0 %v468
    %542 = vmatpush1.bf16.msra.mxu0 %v467
    %543 = vmatprep.subr.bf16.mxu0 %v466
    %544 = vmatpush1.bf16.msra.mxu0 %v465
    %545 = vmatprep.subr.bf16.mxu0 %v496
    %546 = vmatpush2.bf16.msra.mxu0 %v495
    %547 = vmatprep.subr.bf16.mxu0 %v494
    %548 = vmatpush2.bf16.msra.mxu0 %v493
    %549 = vmatprep.subr.bf16.mxu0 %v492
    %550 = vmatpush2.bf16.msra.mxu0 %v491
    %551 = vmatprep.subr.bf16.mxu0 %v490
    %552 = vmatpush2.bf16.msra.mxu0 %v489
    %553 = vmatprep.subr.bf16.mxu0 %v488
    %554 = vmatpush2.bf16.msra.mxu0 %v487
    %555 = vmatprep.subr.bf16.mxu0 %v486
    %556 = vmatpush2.bf16.msra.mxu0 %v485
    %557 = vmatprep.subr.bf16.mxu0 %v484
    %558 = vmatpush2.bf16.msra.mxu0 %v483
    %559 = vmatprep.subr.bf16.mxu0 %v482
    %560 = vmatpush2.bf16.msra.mxu0 %v481
    %561 = vmatprep.mubr.bf16.mxu0 %v325
    %562 = vmatmul.mubr.bf16.gmra.mxu0 %v324
    %v563 = vpop.f32.mrf.mxu0
    %v564 = vadd.f32 %v362, %v563
    %v565 = vpop.f32.mrf.mxu0
    %v566 = vadd.f32 %v366, %v565
    %v567 = vpop.f32.mrf.mxu0
    %v568 = vpop.f32.mrf.mxu0
    %569 = vdwg.mxu0
    %v570 = vpack.c.bf16 %v564, %v564
    %v571 = vpack.c.bf16 %v566, %v566
    %vm572 = vcmp.gt.bf16.partialorder %v570, 0
    %vm573 = vcmp.gt.bf16.partialorder %v571, 0
    %v575 = vmul.bf16 %v570, 1069105081
    %v576 = vpow.bf16.pop %v575
    %v578 = vmul.bf16 %v571, 1069105081
    %v579 = vpow.bf16.pop %v578
    %v580 = vsub.bf16 %v576, 1065369472
    %v581 = vsub.bf16 %v579, 1065369472
    %v582 = vsel %vm572, %v570, %v580
    %v583 = vsel %vm573, %v571, %v581
    %v584 = vld [vmem:[%s5] sm:$0xf]
    %v585 = vld [vmem:[%s5 + $0x4] sm:$0xf]
    %v586 = vld [vmem:[%s5 + $0x8] sm:$0xf]
    %v587 = vld [vmem:[%s5 + $0xc] sm:$0xf]
    %v588 = vld [vmem:[%s5 + $0x10] sm:$0xf]
    %v589 = vld [vmem:[%s5 + $0x14] sm:$0xf]
    %v590 = vld [vmem:[%s5 + $0x18] sm:$0xf]
    %v591 = vld [vmem:[%s5 + $0x1c] sm:$0xf]
    %v592 = vld [vmem:[%s5 + $0x20] sm:$0xf]
    %v593 = vld [vmem:[%s5 + $0x24] sm:$0xf]
    %v594 = vld [vmem:[%s5 + $0x28] sm:$0xf]
    %v595 = vld [vmem:[%s5 + $0x2c] sm:$0xf]
    %v596 = vld [vmem:[%s5 + $0x30] sm:$0xf]
    %v597 = vld [vmem:[%s5 + $0x34] sm:$0xf]
    %v598 = vld [vmem:[%s5 + $0x38] sm:$0xf]
    %v599 = vld [vmem:[%s5 + $0x3c] sm:$0xf]
    %v600 = vld [vmem:[%s5 + $0x40] sm:$0xf]
    %v601 = vld [vmem:[%s5 + $0x44] sm:$0xf]
    %v602 = vld [vmem:[%s5 + $0x48] sm:$0xf]
    %v603 = vld [vmem:[%s5 + $0x4c] sm:$0xf]
    %v604 = vld [vmem:[%s5 + $0x50] sm:$0xf]
    %v605 = vld [vmem:[%s5 + $0x54] sm:$0xf]
    %v606 = vld [vmem:[%s5 + $0x58] sm:$0xf]
    %v607 = vld [vmem:[%s5 + $0x5c] sm:$0xf]
    %v608 = vld [vmem:[%s5 + $0x60] sm:$0xf]
    %v609 = vld [vmem:[%s5 + $0x64] sm:$0xf]
    %v610 = vld [vmem:[%s5 + $0x68] sm:$0xf]
    %v611 = vld [vmem:[%s5 + $0x6c] sm:$0xf]
    %v612 = vld [vmem:[%s5 + $0x70] sm:$0xf]
    %v613 = vld [vmem:[%s5 + $0x74] sm:$0xf]
    %v614 = vld [vmem:[%s5 + $0x78] sm:$0xf]
    %v615 = vld [vmem:[%s5 + $0x7c] sm:$0xf]
    %v617 = vlaneseq
    %v618 = vshrl.u32 %v617, 7
    %v619 = vsub.s32 0, %v618
    %v620 = vrot.slane %v59, %v619
    %v654 = vunpack.c.l.b16 %v584
    %v655 = vunpack.c.l.b16 %v585
    %v656 = vunpack.c.l.b16 %v586
    %v657 = vunpack.c.l.b16 %v587
    %v658 = vunpack.c.l.b16 %v588
    %v659 = vunpack.c.l.b16 %v589
    %v660 = vunpack.c.l.b16 %v590
    %v661 = vunpack.c.l.b16 %v591
    %v662 = vunpack.c.l.b16 %v592
    %v663 = vunpack.c.l.b16 %v593
    %v664 = vunpack.c.l.b16 %v594
    %v665 = vunpack.c.l.b16 %v595
    %v666 = vunpack.c.l.b16 %v596
    %v667 = vunpack.c.l.b16 %v597
    %v668 = vunpack.c.l.b16 %v598
    %v669 = vunpack.c.l.b16 %v599
    %v670 = vunpack.c.l.b16 %v600
    %v671 = vunpack.c.l.b16 %v601
    %v672 = vunpack.c.l.b16 %v602
    %v673 = vunpack.c.l.b16 %v603
    %v674 = vunpack.c.l.b16 %v604
    %v675 = vunpack.c.l.b16 %v605
    %v676 = vunpack.c.l.b16 %v606
    %v677 = vunpack.c.l.b16 %v607
    %v678 = vunpack.c.l.b16 %v608
    %v679 = vunpack.c.l.b16 %v609
    %v680 = vunpack.c.l.b16 %v610
    %v681 = vunpack.c.l.b16 %v611
    %v682 = vunpack.c.l.b16 %v612
    %v683 = vunpack.c.l.b16 %v613
    %v684 = vunpack.c.l.b16 %v614
    %v685 = vunpack.c.l.b16 %v615
    %v686 = vpack.c.b16 %v655, %v654
    %v687 = vpack.c.b16 %v657, %v656
    %v688 = vpack.c.b16 %v659, %v658
    %v689 = vpack.c.b16 %v661, %v660
    %v690 = vpack.c.b16 %v663, %v662
    %v691 = vpack.c.b16 %v665, %v664
    %v692 = vpack.c.b16 %v667, %v666
    %v693 = vpack.c.b16 %v669, %v668
    %v694 = vpack.c.b16 %v671, %v670
    %v695 = vpack.c.b16 %v673, %v672
    %v696 = vpack.c.b16 %v675, %v674
    %v697 = vpack.c.b16 %v677, %v676
    %v698 = vpack.c.b16 %v679, %v678
    %v699 = vpack.c.b16 %v681, %v680
    %v700 = vpack.c.b16 %v683, %v682
    %v701 = vpack.c.b16 %v685, %v684
    %718 = vmatprep.subr.bf16.mxu0 0
    %719 = vmatpush1.bf16.msra.mxu0 %v693
    %720 = vmatprep.subr.bf16.mxu0 0
    %721 = vmatpush1.bf16.msra.mxu0 %v692
    %722 = vmatprep.subr.bf16.mxu0 0
    %723 = vmatpush1.bf16.msra.mxu0 %v691
    %724 = vmatprep.subr.bf16.mxu0 0
    %725 = vmatpush1.bf16.msra.mxu0 %v690
    %726 = vmatprep.subr.bf16.mxu0 0
    %727 = vmatpush1.bf16.msra.mxu0 %v689
    %728 = vmatprep.subr.bf16.mxu0 0
    %729 = vmatpush1.bf16.msra.mxu0 %v688
    %730 = vmatprep.subr.bf16.mxu0 0
    %731 = vmatpush1.bf16.msra.mxu0 %v687
    %732 = vmatprep.subr.bf16.mxu0 0
    %733 = vmatpush1.bf16.msra.mxu0 %v686
    %734 = vmatprep.subr.bf16.mxu0 0
    %735 = vmatpush2.bf16.msra.mxu0 %v701
    %736 = vmatprep.subr.bf16.mxu0 0
    %737 = vmatpush2.bf16.msra.mxu0 %v700
    %738 = vmatprep.subr.bf16.mxu0 0
    %739 = vmatpush2.bf16.msra.mxu0 %v699
    %740 = vmatprep.subr.bf16.mxu0 0
    %741 = vmatpush2.bf16.msra.mxu0 %v698
    %742 = vmatprep.subr.bf16.mxu0 0
    %743 = vmatpush2.bf16.msra.mxu0 %v697
    %744 = vmatprep.subr.bf16.mxu0 0
    %745 = vmatpush2.bf16.msra.mxu0 %v696
    %746 = vmatprep.subr.bf16.mxu0 0
    %747 = vmatpush2.bf16.msra.mxu0 %v695
    %748 = vmatprep.subr.bf16.mxu0 0
    %749 = vmatpush2.bf16.msra.mxu0 %v694
    %750 = vmatprep.mubr.bf16.mxu0 %v583
    %751 = vmatmul.mubr.bf16.gmra.mxu0 %v582
    %v752 = vpop.f32.mrf.mxu0
    %v753 = vadd.f32 %v620, %v752
    %v754 = vpop.f32.mrf.mxu0
    %v755 = vpop.f32.mrf.mxu0
    %v756 = vpop.f32.mrf.mxu0
    %757 = vdwg.mxu0
    %vm758 = vcmask 261120
    %759 = vst.msk [vmem:[#allocation7] sm:$0xff] %vm758, %v753
    // Predicated region
    $region38: #{tpu_custom_call.1} parent=1 // pred_check
      _
    $region39: #{tpu_custom_call.1} parent=1 // pred_check_branch
      %761 = sbr.rel (0) target = $region41
    $region40: #{tpu_custom_call.1} parent=1 // pred_region
      %s763 = ssub.s32 128, 128
      %764 = vsyncadd [#allocation4], %s763
      %s766 = sshll.u32 [#allocation7], 4
      %s767 = int_to_ptr.vmem [resolvable:$true] %s766
      %769 = dma.vmem_to_hbm [thread:$0]  %s767, 128, %s7, [#allocation4]
    $region41: #{tpu_custom_call.1} parent=1 // pred_fallthru
      _
    // Predicated region
    $region42: #{tpu_custom_call.1} parent=1 // pred_check
      _
    $region43: #{tpu_custom_call.1} parent=1 // pred_check_branch
      %771 = sbr.rel (0) target = $region45
    $region44: #{tpu_custom_call.1} parent=1 // pred_region
      %772 = dma.done [#allocation4], 128
    $region45: #{tpu_custom_call.1} parent=1 // pred_fallthru
      _
    %773 = vsyncpa [#allocation3], 1
    %774 = vsyncpa [#allocation6], 1
    %775 = vsyncpa [#allocation4], 1

</llo_original>
